<compile_context>
chip_gen: v7x
topology: tpu7x:2x2x1
jax: 0.10.0
libtpu: 0.0.40
codegen_flags: <defaults>
</compile_context>

<pallas_src>
import functools
import math

import jax
import jax.numpy as jnp
from jax.experimental import pallas as pl
from jax.experimental.pallas import tpu as pltpu


def _round_up(x: int, m: int) -> int:
    return (x + m - 1) // m * m


def _sublane(dtype) -> int:
    # minimum sublane tile for this dtype: 8 for f32, 16 for bf16, 32 for int8/fp8
    return max(8, 32 // jnp.dtype(dtype).itemsize)


def _vmem_capacity_bytes() -> int:
    try:
        info = pltpu.get_tpu_info()
        cap = getattr(info, "vmem_capacity_bytes", None)
        if cap:
            return int(cap)
    except Exception:
        pass
    return 64 * 1024 * 1024  # conservative (v7x-sized) default if the query fails


def siren_kernel(x_ref, wT_ref, b_ref, o_ref):
    # MXU matmul with f32 accumulation.  w0 is already folded into W^T and the
    # bias in the wrapper, so the epilogue is only bias-add + sin.
    acc = jnp.dot(x_ref[...], wT_ref[...], preferred_element_type=jnp.float32)
    o_ref[...] = jnp.sin(acc + b_ref[...]).astype(o_ref.dtype)


@functools.partial(jax.jit, static_argnames=("tm",))
def siren_forward(x, weight, bias, w0, *, tm=None):
    """x: [..., dim_in], weight: [dim_out, dim_in], bias: [dim_out] or None."""
    dim_out, dim_in = weight.shape
    lead_shape = x.shape[:-1]
    x2d = x.reshape(-1, dim_in)
    n = x2d.shape[0]
    dtype = x.dtype
    x_bytes = jnp.dtype(dtype).itemsize
    w_bytes = jnp.dtype(weight.dtype).itemsize
    out_bytes = x_bytes

    # ---- generation-aware VMEM budgeting ------------------------------------
    vmem_cap = _vmem_capacity_bytes()
    if vmem_cap >= 96 * 1024 * 1024:          # v5e / v6e: 128 MiB VMEM per core
        budget, vmem_limit, residency = 80 << 20, 100 << 20, 8192
    else:                                     # v7x: 64 MiB VMEM per core
        budget, vmem_limit, residency = 36 << 20, 48 << 20, 4096

    # ---- lane tiling ---------------------------------------------------------
    # Keep the true dim_out as one full-extent lane block when the (double-
    # buffered) weight fits comfortably -> weight fetched once, no padded writes,
    # no post-kernel column slice.  Only very wide layers tile dim_out.
    resident = (dim_out <= residency
                and 2 * dim_in * dim_out * w_bytes <= budget // 2)
    tn = dim_out if resident else min(512, _round_up(dim_out, 128))

    # ---- row tiling ----------------------------------------------------------
    sub = _sublane(dtype)
    if tm is None:
        tm_cap = 2048 if (dim_in <= 512 and tn <= 512) else 1024
    else:
        tm_cap = max(sub, _round_up(tm, sub))
    tm_eff = max(sub, min(tm_cap, _round_up(n, sub)))

    def vmem_use(tm_, tn_):
        return (2 * tm_ * dim_in * x_bytes       # x tile (double-buffered)
                + 2 * tm_ * tn_ * out_bytes      # out tile (double-buffered)
                + tm_ * tn_ * 4                  # f32 acc / sin intermediate
                + 2 * dim_in * tn_ * w_bytes     # W^T tile (double-buffered)
                + 2 * tn_ * 4)                   # scaled bias row (f32)

    while vmem_use(tm_eff, tn) > budget:
        if (not resident) and tn > 128 and (tn >= tm_eff or tm_eff <= 256):
            tn = max(128, tn // 2)               # shrink lanes in the wide path
        elif tm_eff > sub:
            tm_eff = max(sub, _round_up(tm_eff // 2, sub))
        else:
            break
    # TODO(synk): add a K-grid axis with an f32 VMEM accumulator (+ @pl.when
    # init/finalize) for very large dim_in where a full-K weight tile cannot fit
    # next to a reasonable row tile.
    # TODO(synk): for multi-layer SIREN stacks, fuse consecutive layers into one
    # pallas_call keeping all hidden weights resident to cut activation HBM traffic.

    grid_m = pl.cdiv(n, tm_eff)
    grid_n = pl.cdiv(dim_out, tn)

    # ---- fold w0 into weight and bias (scale in f32, cast once) --------------
    w0f = jnp.asarray(w0, jnp.float32)
    wT = (weight.astype(jnp.float32) * w0f).T.astype(weight.dtype)   # [dim_in, dim_out]
    if bias is None:
        b_scaled = jnp.zeros((1, dim_out), jnp.float32)
    else:
        b_scaled = (bias.astype(jnp.float32) * w0f).reshape(1, dim_out)

    grid_spec = pltpu.PrefetchScalarGridSpec(
        num_scalar_prefetch=0,
        grid=(grid_m, grid_n),
        in_specs=[
            pl.BlockSpec((tm_eff, dim_in), lambda i, j: (i, 0)),   # row tile of x
            pl.BlockSpec((dim_in, tn), lambda i, j: (0, j)),       # W^T tile
            pl.BlockSpec((1, tn), lambda i, j: (0, j)),            # scaled bias row
        ],
        out_specs=pl.BlockSpec((tm_eff, tn), lambda i, j: (i, j)),
    )

    out2d = pl.pallas_call(
        siren_kernel,
        out_shape=jax.ShapeDtypeStruct((n, dim_out), dtype),
        grid_spec=grid_spec,
        compiler_params=pltpu.CompilerParams(
            dimension_semantics=("parallel", "parallel"),
            vmem_limit_bytes=vmem_limit,
        ),
    )(x2d, wT, b_scaled)

    return out2d.reshape(*lead_shape, dim_out)


def init_siren_params(key, dim_in, dim_out, w0=30.0, c=6.0,
                      is_first=False, use_bias=True, dtype=jnp.float32):
    """Deterministic re-implementation of Siren.init_ (uniform weight, zero bias)."""
    w_std = (1.0 / dim_in) if is_first else (math.sqrt(c / dim_in) / w0)
    weight = jax.random.uniform(key, (dim_out, dim_in),
                                minval=-w_std, maxval=w_std, dtype=dtype)
    bias = jnp.zeros((dim_out,), dtype=dtype) if use_bias else None
    return weight, bias


def _reference(x, weight, bias, w0):
    out = x @ weight.T
    if bias is not None:
        out = out + bias
    return jnp.sin(w0 * out)


if __name__ == "__main__":
    key = jax.random.PRNGKey(0)
    k1, k2, k3, k4, k_w, k_w2 = jax.random.split(key, 6)

    dim_in, dim_out = 32, 64
    w0, c = 30.0, 6.0
    weight, bias = init_siren_params(k_w, dim_in, dim_out, w0=w0, c=c,
                                     is_first=False, use_bias=True)

    # 1) small shape consistent with the module: batch=2, seq=8
    x_small = jax.random.normal(k1, (2, 8, dim_in), dtype=jnp.float32)
    out_small = jax.block_until_ready(siren_forward(x_small, weight, bias, w0))
    ref_small = _reference(x_small, weight, bias, w0)
    assert out_small.shape == (2, 8, dim_out)
    assert jnp.allclose(out_small, ref_small, atol=1e-4, rtol=1e-4)

    # 2) ragged row count (exercises the masked tail row block), no bias
    x_rag = jax.random.normal(k2, (3, 7, dim_in), dtype=jnp.float32)
    out_rag = jax.block_until_ready(siren_forward(x_rag, weight, None, w0))
    ref_rag = _reference(x_rag, weight, None, w0)
    assert out_rag.shape == (3, 7, dim_out)
    assert jnp.allclose(out_rag, ref_rag, atol=1e-4, rtol=1e-4)

    # 3) multi-step row grid with a ragged final block (tm=256 -> 5 grid steps)
    x_big = jax.random.normal(k3, (4, 300, dim_in), dtype=jnp.float32)
    out_big = jax.block_until_ready(siren_forward(x_big, weight, bias, w0, tm=256))
    ref_big = _reference(x_big, weight, bias, w0)
    assert out_big.shape == (4, 300, dim_out)
    assert jnp.allclose(out_big, ref_big, atol=1e-4, rtol=1e-4)

    # 4) narrow output layer (dim_out=3, like a final RGB head): full-extent,
    #    unpadded lane block -> no write amplification / column slice.
    weight3, bias3 = init_siren_params(k_w2, dim_in, 3, w0=w0, c=c,
                                       is_first=False, use_bias=True)
    x_rgb = jax.random.normal(k4, (2, 8, dim_in), dtype=jnp.float32)
    out_rgb = jax.block_until_ready(siren_forward(x_rgb, weight3, bias3, w0))
    ref_rgb = _reference(x_rgb, weight3, bias3, w0)
    assert out_rgb.shape == (2, 8, 3)
    assert jnp.allclose(out_rgb, ref_rgb, atol=1e-4, rtol=1e-4)

    print("KERNEL_OK")
</pallas_src>

<mosaic_0001>
module attributes {stable_mosaic.version = 11 : i64} {
  func.func @siren_kernel(%arg0: i32, %arg1: i32, %arg2: memref<16x32xf32, #tpu.memory_space<vmem>>, %arg3: memref<32x64xf32, #tpu.memory_space<vmem>>, %arg4: memref<1x64xf32, #tpu.memory_space<vmem>>, %arg5: memref<16x64xf32, #tpu.memory_space<vmem>>) attributes {dimension_semantics = [#tpu.dimension_semantics<parallel>, #tpu.dimension_semantics<parallel>], iteration_bounds = array<i64: 1, 1>, scalar_prefetch = 0 : i64, scratch_operands = 0 : i64, tpu.core_type = #tpu.core_type<tc>, window_params = [{transform_indices = @transform_0, window_bounds = array<i64: 16, 32>}, {transform_indices = @transform_1, window_bounds = array<i64: 32, 64>}, {transform_indices = @transform_2, window_bounds = array<i64: 1, 64>}, {transform_indices = @transform_3, window_bounds = array<i64: 16, 64>}]} {
    %c0 = arith.constant 0 : index
    %c0_0 = arith.constant 0 : index
    %0 = vector.load %arg2[%c0, %c0_0] : memref<16x32xf32, #tpu.memory_space<vmem>>, vector<16x32xf32>
    %c0_1 = arith.constant 0 : index
    %c0_2 = arith.constant 0 : index
    %1 = vector.load %arg3[%c0_1, %c0_2] : memref<32x64xf32, #tpu.memory_space<vmem>>, vector<32x64xf32>
    %cst = arith.constant dense<0.000000e+00> : vector<16x64xf32>
    %2 = tpu.matmul %0, %1, %cst {dimension_numbers = #tpu.dot_dimension_numbers<[1], [0], [0], [1], [0, 0, 1, 1], [], []>} : vector<16x32xf32>, vector<32x64xf32>, vector<16x64xf32> -> vector<16x64xf32>
    %c0_3 = arith.constant 0 : index
    %c0_4 = arith.constant 0 : index
    %3 = vector.load %arg4[%c0_3, %c0_4] : memref<1x64xf32, #tpu.memory_space<vmem>>, vector<1x64xf32>
    %4 = vector.broadcast %3 : vector<1x64xf32> to vector<16x64xf32>
    %5 = arith.addf %2, %4 : vector<16x64xf32>
    %6 = math.sin %5 : vector<16x64xf32>
    %c0_5 = arith.constant 0 : index
    %c0_6 = arith.constant 0 : index
    %7 = vector.load %arg5[%c0_5, %c0_6] : memref<16x64xf32, #tpu.memory_space<vmem>>, vector<16x64xf32>
    tpu.vector_store %arg5[%c0_5, %c0_6], %6 {strides = array<i32>} : memref<16x64xf32, #tpu.memory_space<vmem>>, vector<16x64xf32>,
    return
  }
  func.func @transform_0(%arg0: i32, %arg1: i32) -> (i32, i32) {
    %c0_i32 = arith.constant 0 : i32
    %c0_i32_0 = arith.constant 0 : i32
    return %arg0, %c0_i32 : i32, i32
  }
  func.func @transform_1(%arg0: i32, %arg1: i32) -> (i32, i32) {
    %c0_i32 = arith.constant 0 : i32
    %c0_i32_0 = arith.constant 0 : i32
    return %c0_i32, %arg1 : i32, i32
  }
  func.func @transform_2(%arg0: i32, %arg1: i32) -> (i32, i32) {
    %c0_i32 = arith.constant 0 : i32
    %c0_i32_0 = arith.constant 0 : i32
    return %c0_i32, %arg1 : i32, i32
  }
  func.func @transform_3(%arg0: i32, %arg1: i32) -> (i32, i32) {
    %c0_i32 = arith.constant 0 : i32
    return %arg0, %arg1 : i32, i32
  }
}

</mosaic_0001>

<llo_original>
// kernel: siren_forward.1
$region0: #{siren_forward.1}
  #allocation0 [shape = 'u32[]', space=smem, size = 0x4, offset = 0x4, fixed_abs, tag = 'smem constant byte address 0x4 - core index']
  #allocation1 [shape = 'u32[144,128]{1,0:T(1,128)}', space=vmem, size = 0x12000, scoped, tag = 'internal scratch']
  %s0 = inlined_call_operand.vmem [shape: f32[16,32], index: 0, kind: input, shape index: {}]
  %s1 = inlined_call_operand.vmem [shape: f32[32,64], index: 1, kind: input, shape index: {}]
  %s2 = inlined_call_operand.vmem [shape: f32[1,64], index: 2, kind: input, shape index: {}]
  %s3 = inlined_call_operand.hbm [shape: f32[16,64], index: 3, kind: output, shape index: {}]
  %s4 = sld [smem:[#allocation0]]
  $region22: #{siren_forward.1} parent=0
    _
  %s6 = ssub.s32 1, %s4
  %s7 = scalar_select 0, %s6, %s4
  $region1: #{siren_forward.1} parent=0
    #allocation2 [shape = 'u8[8192]{0}', space=vmem, size = 0x2000, scoped, tag = 'output window, operand 0, single buffered']
    #allocation3 [shape = 's32[1]{0}', space=sflag, size = 0x4, scoped, tag = 'scoped memory for siren_forward.1']
    %8 = vsyncpa [#allocation3], 0
    // Predicated region
    $region2: #{siren_forward.1} parent=1 // pred_check
      _
    $region3: #{siren_forward.1} parent=1 // pred_check_branch
      %10 = sbr.rel (0) target = $region5
    $region4: #{siren_forward.1} parent=1 // pred_region
      _
    $region5: #{siren_forward.1} parent=1 // pred_fallthru
      _
    // Predicated region
    $region6: #{siren_forward.1} parent=1 // pred_check
      _
    $region7: #{siren_forward.1} parent=1 // pred_check_branch
      %12 = sbr.rel (0) target = $region9
    $region8: #{siren_forward.1} parent=1 // pred_region
      _
    $region9: #{siren_forward.1} parent=1 // pred_fallthru
      _
    // Predicated region
    $region10: #{siren_forward.1} parent=1 // pred_check
      _
    $region11: #{siren_forward.1} parent=1 // pred_check_branch
      %14 = sbr.rel (0) target = $region13
    $region12: #{siren_forward.1} parent=1 // pred_region
      _
    $region13: #{siren_forward.1} parent=1 // pred_fallthru
      _
    %v15 = vld [vmem:[%s0] sm:$0xff]
    %v16 = vld [vmem:[%s0 + $0x8] sm:$0xff]
    %v17 = vld [vmem:[%s1] sm:$0xff]
    %v18 = vld [vmem:[%s1 + $0x8] sm:$0xff]
    %v19 = vld [vmem:[%s1 + $0x10] sm:$0xff]
    %v20 = vld [vmem:[%s1 + $0x18] sm:$0xff]
    %v21 = vld [vmem:[%s2] sm:$0x1]
    %v23 = vlaneseq
    %v24 = vshrl.u32 %v23, 7
    %v25 = vsub.s32 0, %v24
    %v26 = vrot.slane %v21, %v25
    %vm28 = vcmask 261120
    %v30 = vsel %vm28, %v15, 0
    %v33 = vsel %vm28, %v16, 0
    %35 = vmatprep.subr.mxu0 0.0
    %36 = vmatpush1.msra.mxu0 %v17
    %37 = vmatprep.subr.mxu0 0.0
    %38 = vmatpush1.msra.mxu0 %v18
    %39 = vmatprep.subr.mxu0 0.0
    %40 = vmatpush1.msra.mxu0 %v19
    %41 = vmatprep.subr.mxu0 0.0
    %42 = vmatpush1.msra.mxu0 %v20
    %43 = vmatprep.subr.mxu0 0.0
    %44 = vmatpush1.msra.mxu0 0.0
    %45 = vmatprep.subr.mxu0 0.0
    %46 = vmatpush1.msra.mxu0 0.0
    %47 = vmatprep.subr.mxu0 0.0
    %48 = vmatpush1.msra.mxu0 0.0
    %49 = vmatprep.subr.mxu0 0.0
    %50 = vmatpush1.msra.mxu0 0.0
    %51 = vmatprep.subr.mxu0 0.0
    %52 = vmatpush1.msra.mxu0 0.0
    %53 = vmatprep.subr.mxu0 0.0
    %54 = vmatpush1.msra.mxu0 0.0
    %55 = vmatprep.subr.mxu0 0.0
    %56 = vmatpush1.msra.mxu0 0.0
    %57 = vmatprep.subr.mxu0 0.0
    %58 = vmatpush1.msra.mxu0 0.0
    %59 = vmatprep.subr.mxu0 0.0
    %60 = vmatpush1.msra.mxu0 0.0
    %61 = vmatprep.subr.mxu0 0.0
    %62 = vmatpush1.msra.mxu0 0.0
    %63 = vmatprep.subr.mxu0 0.0
    %64 = vmatpush1.msra.mxu0 0.0
    %65 = vmatprep.subr.mxu0 0.0
    %66 = vmatpush1.msra.mxu0 0.0
    %67 = vmatprep.subr.mxu0 0.0
    %68 = vmatpush1.msra.mxu0 0.0
    %69 = vmatprep.subr.mxu0 0.0
    %70 = vmatpush1.msra.mxu0 0.0
    %71 = vmatprep.subr.mxu0 0.0
    %72 = vmatpush1.msra.mxu0 0.0
    %73 = vmatprep.subr.mxu0 0.0
    %74 = vmatpush1.msra.mxu0 0.0
    %75 = vmatprep.subr.mxu0 0.0
    %76 = vmatpush1.msra.mxu0 0.0
    %77 = vmatprep.subr.mxu0 0.0
    %78 = vmatpush1.msra.mxu0 0.0
    %79 = vmatprep.subr.mxu0 0.0
    %80 = vmatpush1.msra.mxu0 0.0
    %81 = vmatprep.subr.mxu0 0.0
    %82 = vmatpush1.msra.mxu0 0.0
    %83 = vmatprep.subr.mxu0 0.0
    %84 = vmatpush1.msra.mxu0 0.0
    %85 = vmatprep.subr.mxu0 0.0
    %86 = vmatpush1.msra.mxu0 0.0
    %87 = vmatprep.subr.mxu0 0.0
    %88 = vmatpush1.msra.mxu0 0.0
    %89 = vmatprep.subr.mxu0 0.0
    %90 = vmatpush1.msra.mxu0 0.0
    %91 = vmatprep.subr.mxu0 0.0
    %92 = vmatpush1.msra.mxu0 0.0
    %93 = vmatprep.subr.mxu0 0.0
    %94 = vmatpush1.msra.mxu0 0.0
    %95 = vmatprep.subr.mxu0 0.0
    %96 = vmatpush1.msra.mxu0 0.0
    %97 = vmatprep.subr.mxu0 0.0
    %98 = vmatpush1.msra.mxu0 0.0
    %99 = vmatprep.mubr.f32.mxu0 0.0
    %100 = vmatmul.mubr.f32.gmra.mrb[0].mxu0 %v30
    %v101 = vpop.f32.mrb[0].mxu0
    %v102 = vadd.f32 %v26, %v101
    %v103 = vpop.f32.mrb[0].mxu0
    %104 = vmatprep.mubr.f32.mxu0 0.0
    %105 = vmatmul.mubr.f32.gmra.mrb[0].mxu0 %v33
    %v106 = vpop.f32.mrb[0].mxu0
    %v107 = vadd.f32 %v26, %v106
    %v108 = vpop.f32.mrb[0].mxu0
    %109 = vdwg.mxu0
    %v110 = vand.u32 2147483647, %v102
    %vm111 = vcmp.le.f32.partialorder %v110, 0.7853982
    %vm112 = vcmp.lt.s32.totalorder %v102, 0
    %v113 = vand.u32 %v102, 2139095040
    %v114 = vshrl.u32 %v113, 23
    %v115 = vsub.s32 %v114, 127
    %v116 = vand.u32 2147483647, %v102
    %v117 = vand.u32 %v116, 8388607
    %v118 = vor.u32 %v117, 8388608
    %v119 = vsub.s32 0, %v118
    %v120 = vadd.s32 %v115, 1
    %vm121 = vcmp.gt.s32.totalorder %v120, 0
    %v122 = vsel %vm121, %v120, 0
    %v123 = vshrl.u32 %v122, 5
    %v124 = vand.u32 %v122, 31
    %v125 = vsub.s32 32, %v124
    %v126 = vshrl.u32 683565275, %v125
    %v127 = vshll.u32 683565275, %v124
    %v128 = vshrl.u32 2475754826, %v125
    %v129 = vor.u32 %v127, %v128
    %v130 = vshll.u32 2475754826, %v124
    %v131 = vshrl.u32 2131351028, %v125
    %v132 = vor.u32 %v130, %v131
    %v133 = vshll.u32 2131351028, %v124
    %v134 = vshrl.u32 2102212464, %v125
    %v135 = vor.u32 %v133, %v134
    %v136 = vshll.u32 2102212464, %v124
    %v137 = vshrl.u32 920167782, %v125
    %v138 = vor.u32 %v136, %v137
    %v139 = vshll.u32 920167782, %v124
    %v140 = vshrl.u32 1326507024, %v125
    %v141 = vor.u32 %v139, %v140
    %vm142 = vcmp.lt.s32.totalorder %v123, 1
    %vm143 = vcmp.lt.s32.totalorder %v123, 2
    %vm144 = vcmp.lt.s32.totalorder %v123, 3
    %vm145 = vcmp.lt.s32.totalorder %v123, 4
    %v146 = vsel %vm142, %v126, %v129
    %v147 = vsel %vm145, %v135, 2102212464
    %v148 = vsel %vm144, %v132, %v147
    %v149 = vsel %vm143, %v146, %v148
    %v150 = vsel %vm142, %v129, %v132
    %v151 = vsel %vm145, %v138, 920167782
    %v152 = vsel %vm144, %v135, %v151
    %v153 = vsel %vm143, %v150, %v152
    %v154 = vsel %vm142, %v132, %v135
    %v155 = vsel %vm145, %v141, 1326507024
    %v156 = vsel %vm144, %v138, %v155
    %v157 = vsel %vm143, %v154, %v156
    %v158 = vshll.u32 %v118, 8
    %v159 = vmul.u32.u64.compose %v158, %v157
    %v160 = vextract.low.u32 %v159
    %v161 = vextract.high.u32 %v159
    %v162 = vmul.u32.u64.compose %v158, %v153
    %v163 = vextract.low.u32 %v162
    %v164 = vextract.high.u32 %v162
    %v165 = vmul.u32 %v158, %v149
    %v166 = vadd.s32 %v161, %v163
    %vm167 = vc.u32 %v161, %v163
    %v168 = vadd.s32 %v164, 1
    %v169 = vsel %vm167, %v168, %v164
    %v170 = vadd.s32 %v165, %v169
    %v171 = vadd.s32 %v170, 536870912
    %v172 = vshrl.u32 %v171, 30
    %v173 = vshll.u32 %v172, 30
    %v174 = vsub.s32 %v170, %v173
    %vm175 = vcmp.lt.s32.totalorder %v174, 0
    %v176 = vsub.s32 0, %v174
    %v177 = vsel %vm175, %v176, %v174
    %v178 = vclz %v177
    %v179 = vsub.s32 %v178, 2
    %vm180 = vcmp.gt.s32.totalorder 0, %v179
    %v181 = vsel %vm180, 0, %v179
    %v182 = vsub.s32 32, %v181
    %v183 = vshll.u32 %v174, %v181
    %v184 = vshrl.u32 %v166, %v182
    %v185 = vor.u32 %v183, %v184
    %v186 = vsub.s32 4294967266, %v181
    %v187 = vadd.s32 %v186, 127
    %v188 = vshll.u32 %v187, 23
    %v189 = vor.u32 4788187, %v188
    %v190 = vand.u32 2147483647, %v189
    %v192 = vcvt.s32.f32 %v185
    %v193 = vmul.f32 %v192, %v190
    %v194 = vxor.u32 %v193, 2147483648
    %v195 = vsel %vm112, %v194, %v193
    %v196 = vsub.s32 4, %v172
    %v197 = vsel %vm112, %v196, %v172
    %v198 = vsel %vm111, %v102, %v195
    %v199 = vsel %vm111, 0, %v197
    %v200 = vcosq.f32.pop %v198
    %v201 = vsinq.f32.pop %v198
    %vm202 = vweird.f32 %v102
    %v203 = vadd.s32 %v199, 3
    %v204 = vand.u32 %v203, 3
    %vm205 = vcmp.lt.s32.totalorder %v204, 2
    %vm206 = vcmp.eq.s32.totalorder %v204, 0
    %v207 = vxor.u32 %v201, 2147483648
    %v208 = vsel %vm206, %v200, %v207
    %vm209 = vcmp.eq.s32.totalorder %v204, 2
    %v210 = vxor.u32 %v200, 2147483648
    %v211 = vsel %vm209, %v210, %v201
    %v212 = vsel %vm205, %v208, %v211
    %v213 = vsel %vm202, nan, %v212
    %v214 = vand.u32 2147483647, %v107
    %vm215 = vcmp.le.f32.partialorder %v214, 0.7853982
    %vm216 = vcmp.lt.s32.totalorder %v107, 0
    %v217 = vand.u32 %v107, 2139095040
    %v218 = vshrl.u32 %v217, 23
    %v219 = vsub.s32 %v218, 127
    %v220 = vand.u32 2147483647, %v107
    %v221 = vand.u32 %v220, 8388607
    %v222 = vor.u32 %v221, 8388608
    %v223 = vsub.s32 0, %v222
    %v224 = vadd.s32 %v219, 1
    %vm225 = vcmp.gt.s32.totalorder %v224, 0
    %v226 = vsel %vm225, %v224, 0
    %v227 = vshrl.u32 %v226, 5
    %v228 = vand.u32 %v226, 31
    %v229 = vsub.s32 32, %v228
    %v230 = vshrl.u32 683565275, %v229
    %v231 = vshll.u32 683565275, %v228
    %v232 = vshrl.u32 2475754826, %v229
    %v233 = vor.u32 %v231, %v232
    %v234 = vshll.u32 2475754826, %v228
    %v235 = vshrl.u32 2131351028, %v229
    %v236 = vor.u32 %v234, %v235
    %v237 = vshll.u32 2131351028, %v228
    %v238 = vshrl.u32 2102212464, %v229
    %v239 = vor.u32 %v237, %v238
    %v240 = vshll.u32 2102212464, %v228
    %v241 = vshrl.u32 920167782, %v229
    %v242 = vor.u32 %v240, %v241
    %v243 = vshll.u32 920167782, %v228
    %v244 = vshrl.u32 1326507024, %v229
    %v245 = vor.u32 %v243, %v244
    %vm246 = vcmp.lt.s32.totalorder %v227, 1
    %vm247 = vcmp.lt.s32.totalorder %v227, 2
    %vm248 = vcmp.lt.s32.totalorder %v227, 3
    %vm249 = vcmp.lt.s32.totalorder %v227, 4
    %v250 = vsel %vm246, %v230, %v233
    %v251 = vsel %vm249, %v239, 2102212464
    %v252 = vsel %vm248, %v236, %v251
    %v253 = vsel %vm247, %v250, %v252
    %v254 = vsel %vm246, %v233, %v236
    %v255 = vsel %vm249, %v242, 920167782
    %v256 = vsel %vm248, %v239, %v255
    %v257 = vsel %vm247, %v254, %v256
    %v258 = vsel %vm246, %v236, %v239
    %v259 = vsel %vm249, %v245, 1326507024
    %v260 = vsel %vm248, %v242, %v259
    %v261 = vsel %vm247, %v258, %v260
    %v262 = vshll.u32 %v222, 8
    %v263 = vmul.u32.u64.compose %v262, %v261
    %v264 = vextract.low.u32 %v263
    %v265 = vextract.high.u32 %v263
    %v266 = vmul.u32.u64.compose %v262, %v257
    %v267 = vextract.low.u32 %v266
    %v268 = vextract.high.u32 %v266
    %v269 = vmul.u32 %v262, %v253
    %v270 = vadd.s32 %v265, %v267
    %vm271 = vc.u32 %v265, %v267
    %v272 = vadd.s32 %v268, 1
    %v273 = vsel %vm271, %v272, %v268
    %v274 = vadd.s32 %v269, %v273
    %v275 = vadd.s32 %v274, 536870912
    %v276 = vshrl.u32 %v275, 30
    %v277 = vshll.u32 %v276, 30
    %v278 = vsub.s32 %v274, %v277
    %vm279 = vcmp.lt.s32.totalorder %v278, 0
    %v280 = vsub.s32 0, %v278
    %v281 = vsel %vm279, %v280, %v278
    %v282 = vclz %v281
    %v283 = vsub.s32 %v282, 2
    %vm284 = vcmp.gt.s32.totalorder 0, %v283
    %v285 = vsel %vm284, 0, %v283
    %v286 = vsub.s32 32, %v285
    %v287 = vshll.u32 %v278, %v285
    %v288 = vshrl.u32 %v270, %v286
    %v289 = vor.u32 %v287, %v288
    %v290 = vsub.s32 4294967266, %v285
    %v291 = vadd.s32 %v290, 127
    %v292 = vshll.u32 %v291, 23
    %v293 = vor.u32 4788187, %v292
    %v294 = vand.u32 2147483647, %v293
    %v296 = vcvt.s32.f32 %v289
    %v297 = vmul.f32 %v296, %v294
    %v298 = vxor.u32 %v297, 2147483648
    %v299 = vsel %vm216, %v298, %v297
    %v300 = vsub.s32 4, %v276
    %v301 = vsel %vm216, %v300, %v276
    %v302 = vsel %vm215, %v107, %v299
    %v303 = vsel %vm215, 0, %v301
    %v304 = vcosq.f32.pop %v302
    %v305 = vsinq.f32.pop %v302
    %vm306 = vweird.f32 %v107
    %v307 = vadd.s32 %v303, 3
    %v308 = vand.u32 %v307, 3
    %vm309 = vcmp.lt.s32.totalorder %v308, 2
    %vm310 = vcmp.eq.s32.totalorder %v308, 0
    %v311 = vxor.u32 %v305, 2147483648
    %v312 = vsel %vm310, %v304, %v311
    %vm313 = vcmp.eq.s32.totalorder %v308, 2
    %v314 = vxor.u32 %v304, 2147483648
    %v315 = vsel %vm313, %v314, %v305
    %v316 = vsel %vm309, %v312, %v315
    %v317 = vsel %vm306, nan, %v316
    %vm318 = vcmask 523264
    %319 = vst.msk [vmem:[#allocation2] sm:$0xff] %vm318, %v213
    %320 = vst.msk [vmem:[#allocation2 + $0x8] sm:$0xff] %vm318, %v317
    // Predicated region
    $region14: #{siren_forward.1} parent=1 // pred_check
      _
    $region15: #{siren_forward.1} parent=1 // pred_check_branch
      %322 = sbr.rel (0) target = $region17
    $region16: #{siren_forward.1} parent=1 // pred_region
      %s324 = ssub.s32 256, 256
      %325 = vsyncadd [#allocation3], %s324
      %s326 = sshll.u32 [#allocation2], 4
      %s327 = int_to_ptr.vmem [resolvable:$true] %s326
      %332 = dma.vmem_to_hbm [thread:$0]  %s327, 256, %s3, [#allocation3], 128, 128, 8
    $region17: #{siren_forward.1} parent=1 // pred_fallthru
      _
    // Predicated region
    $region18: #{siren_forward.1} parent=1 // pred_check
      _
    $region19: #{siren_forward.1} parent=1 // pred_check_branch
      %334 = sbr.rel (0) target = $region21
    $region20: #{siren_forward.1} parent=1 // pred_region
      %335 = dma.done [#allocation3], 256
    $region21: #{siren_forward.1} parent=1 // pred_fallthru
      _
    %336 = vsyncpa [#allocation3], 1

</llo_original>
